<compile_context>
chip_gen: v7x
topology: tpu7x:2x2x1
jax: 0.10.0
libtpu: 0.0.40
codegen_flags: <defaults>
</compile_context>

<pallas_src>
import functools

import jax
import jax.numpy as jnp
from jax.experimental import pallas as pl
from jax.experimental.pallas import tpu as pltpu


def _gcn_kernel(w_ref, b_ref, x_ref, o_ref):
    # w_ref: (Cout, Cin)   b_ref: (Cout, 1)   x_ref: (Cin, TL)   o_ref: (Cout, TL)
    y = jnp.dot(w_ref[...], x_ref[...], preferred_element_type=jnp.float32)
    y = y + b_ref[...]
    # LeakyReLU with negative slope 0.1
    o_ref[...] = jnp.where(y >= 0.0, y, 0.1 * y).astype(o_ref.dtype)


def _pick_lane_tile(L, lane_tile):
    """Pick a lane tile that satisfies the (8,128) block rule."""
    if L % 128 == 0:
        return min(lane_tile, L)
    if L < 128:
        return L                                  # full extent — always legal
    return min(lane_tile, (L // 128) * 128)       # multiple of 128; tail block masked


def naive_gcn_forward(x, A, weight, bias, *, lane_tile=2048, force_pallas=False):
    """x: (N, C_in, L) float32 (NCL, as in PyTorch).  A: passed through unchanged.
    weight: (C_out, C_in)  (Conv1d weight with the trailing k=1 dim squeezed).
    bias:   (C_out,)
    Returns (y, A) with y: (N, C_out, L)."""
    N, Cin, L = x.shape
    Cout = weight.shape[0]

    # Tiny problems: fixed pallas_call / grid-step overhead dominates — let XLA fuse it.
    if not force_pallas and (N * L) < 4096:
        y = jnp.einsum("oc,ncl->nol", weight, x) + bias[None, :, None]
        return jnp.where(y >= 0.0, y, 0.1 * y), A

    TL = _pick_lane_tile(L, lane_tile)
    grid = (N, pl.cdiv(L, TL))

    b2 = bias.reshape(Cout, 1)

    cost = pl.CostEstimate(
        flops=2 * N * L * Cin * Cout,
        transcendentals=0,
        bytes_accessed=4 * (N * Cin * L + N * Cout * L + Cout * Cin + Cout),
    )

    y = pl.pallas_call(
        _gcn_kernel,
        out_shape=jax.ShapeDtypeStruct((N, Cout, L), jnp.float32),
        grid=grid,
        in_specs=[
            pl.BlockSpec((Cout, Cin), lambda n, l: (0, 0)),        # W, resident
            pl.BlockSpec((Cout, 1), lambda n, l: (0, 0)),          # bias, resident
            pl.BlockSpec((None, Cin, TL), lambda n, l: (n, 0, l)),  # X tile (Cin, TL)
        ],
        out_specs=pl.BlockSpec((None, Cout, TL), lambda n, l: (n, 0, l)),
        compiler_params=pltpu.CompilerParams(
            dimension_semantics=("parallel", "parallel"),
        ),
        cost_estimate=cost,
    )(weight, b2, x)

    return y, A


if __name__ == "__main__":
    key = jax.random.PRNGKey(0)
    k_x, k_a, k_w, k_b = jax.random.split(key, 4)

    # Small shapes consistent with the module:
    #   in_channels=4, s_kernel_size=3, out_channels=32 (fixed by the module)
    N, Cin, L = 2, 4, 16
    s_kernel_size = 3
    Cout = 32
    V = 16  # graph size for the adjacency-like tensor A

    x = jax.random.normal(k_x, (N, Cin, L), dtype=jnp.float32)
    A = jax.random.normal(k_a, (N, s_kernel_size, V, V), dtype=jnp.float32)
    assert A.shape[1] == s_kernel_size  # mirrors `assert A.size(1) == self.s_kernel_size`

    # Deterministic parameters (Conv1d(in_channels, 32, kernel_size=1) -> weight (32, Cin), bias (32,))
    weight = 0.1 * jax.random.normal(k_w, (Cout, Cin), dtype=jnp.float32)
    bias = 0.1 * jax.random.normal(k_b, (Cout,), dtype=jnp.float32)

    fwd = jax.jit(functools.partial(naive_gcn_forward, force_pallas=True))
    y, A_out = fwd(x, A, weight, bias)
    y = jax.block_until_ready(y)
    A_out = jax.block_until_ready(A_out)

    # Sanity check against a plain-JAX reference of the same math.
    ref = jnp.einsum("oc,ncl->nol", weight, x) + bias[None, :, None]
    ref = jnp.where(ref >= 0.0, ref, 0.1 * ref)
    assert y.shape == (N, Cout, L)
    assert A_out.shape == A.shape
    assert jnp.allclose(y, ref, atol=1e-5, rtol=1e-5)
    assert jnp.allclose(A_out, A)

    print("KERNEL_OK")
</pallas_src>

<mosaic_0001>
module attributes {stable_mosaic.version = 11 : i64} {
  func.func @_gcn_kernel(%arg0: i32, %arg1: i32, %arg2: memref<32x4xf32, #tpu.memory_space<vmem>>, %arg3: memref<32x1xf32, #tpu.memory_space<vmem>>, %arg4: memref<1x4x16xf32, #tpu.memory_space<vmem>>, %arg5: memref<1x32x16xf32, #tpu.memory_space<vmem>>) attributes {dimension_semantics = [#tpu.dimension_semantics<parallel>, #tpu.dimension_semantics<parallel>], iteration_bounds = array<i64: 2, 1>, scalar_prefetch = 0 : i64, scratch_operands = 0 : i64, tpu.core_type = #tpu.core_type<tc>, window_params = [{pipeline_mode = #tpu.pipeline_mode<synchronous>, transform_indices = @transform_0, window_bounds = array<i64: 32, 4>}, {pipeline_mode = #tpu.pipeline_mode<synchronous>, transform_indices = @transform_1, window_bounds = array<i64: 32, 1>}, {transform_indices = @transform_2, window_bounds = array<i64: 1, 4, 16>}, {transform_indices = @transform_3, window_bounds = array<i64: 1, 32, 16>}]} {
    %c0 = arith.constant 0 : index
    %c0_0 = arith.constant 0 : index
    %0 = vector.load %arg2[%c0, %c0_0] : memref<32x4xf32, #tpu.memory_space<vmem>>, vector<32x4xf32>
    %c0_1 = arith.constant 0 : index
    %c0_2 = arith.constant 0 : index
    %c0_3 = arith.constant 0 : index
    %1 = vector.load %arg4[%c0_1, %c0_2, %c0_3] : memref<1x4x16xf32, #tpu.memory_space<vmem>>, vector<1x4x16xf32>
    %2 = vector.shape_cast %1 : vector<1x4x16xf32> to vector<4x16xf32>
    %cst = arith.constant dense<0.000000e+00> : vector<32x16xf32>
    %3 = tpu.matmul %0, %2, %cst {dimension_numbers = #tpu.dot_dimension_numbers<[1], [0], [0], [1], [0, 0, 1, 1], [], []>} : vector<32x4xf32>, vector<4x16xf32>, vector<32x16xf32> -> vector<32x16xf32>
    %c0_4 = arith.constant 0 : index
    %c0_5 = arith.constant 0 : index
    %4 = vector.load %arg3[%c0_4, %c0_5] : memref<32x1xf32, #tpu.memory_space<vmem>>, vector<32x1xf32>
    %5 = vector.broadcast %4 : vector<32x1xf32> to vector<32x16xf32>
    %6 = arith.addf %3, %5 : vector<32x16xf32>
    %cst_6 = arith.constant 0.000000e+00 : f32
    %7 = vector.broadcast %cst_6 : f32 to vector<32x16xf32>
    %8 = arith.cmpf oge, %6, %7 : vector<32x16xf32>
    %cst_7 = arith.constant 1.000000e-01 : f32
    %9 = vector.broadcast %cst_7 : f32 to vector<32x16xf32>
    %10 = arith.mulf %9, %6 : vector<32x16xf32>
    %11 = arith.select %8, %6, %10 : vector<32x16xi1>, vector<32x16xf32>
    %c0_8 = arith.constant 0 : index
    %c0_9 = arith.constant 0 : index
    %c0_10 = arith.constant 0 : index
    %12 = vector.load %arg5[%c0_8, %c0_9, %c0_10] : memref<1x32x16xf32, #tpu.memory_space<vmem>>, vector<1x32x16xf32>
    %13 = vector.shape_cast %12 : vector<1x32x16xf32> to vector<32x16xf32>
    %14 = vector.shape_cast %11 : vector<32x16xf32> to vector<1x32x16xf32>
    tpu.vector_store %arg5[%c0_8, %c0_9, %c0_10], %14 {strides = array<i32>} : memref<1x32x16xf32, #tpu.memory_space<vmem>>, vector<1x32x16xf32>,
    return
  }
  func.func @transform_0(%arg0: i32, %arg1: i32) -> (i32, i32) {
    %c0_i32 = arith.constant 0 : i32
    %c0_i32_0 = arith.constant 0 : i32
    %c0_i32_1 = arith.constant 0 : i32
    return %c0_i32, %c0_i32_0 : i32, i32
  }
  func.func @transform_1(%arg0: i32, %arg1: i32) -> (i32, i32) {
    %c0_i32 = arith.constant 0 : i32
    %c0_i32_0 = arith.constant 0 : i32
    %c0_i32_1 = arith.constant 0 : i32
    return %c0_i32, %c0_i32_0 : i32, i32
  }
  func.func @transform_2(%arg0: i32, %arg1: i32) -> (i32, i32, i32) {
    %c0_i32 = arith.constant 0 : i32
    %c0_i32_0 = arith.constant 0 : i32
    return %arg0, %c0_i32, %arg1 : i32, i32, i32
  }
  func.func @transform_3(%arg0: i32, %arg1: i32) -> (i32, i32, i32) {
    %c0_i32 = arith.constant 0 : i32
    %c0_i32_0 = arith.constant 0 : i32
    return %arg0, %c0_i32, %arg1 : i32, i32, i32
  }
}

</mosaic_0001>

<llo_original>
// kernel: naive_gcn_forward.1
$region0: #{naive_gcn_forward.1}
  #allocation0 [shape = 'u32[]', space=smem, size = 0x4, offset = 0x4, fixed_abs, tag = 'smem constant byte address 0x4 - core index']
  #allocation1 [shape = 'u32[144,128]{1,0:T(1,128)}', space=vmem, size = 0x12000, scoped, tag = 'internal scratch']
  %s0 = inlined_call_operand.vmem [shape: f32[32,4], index: 0, kind: input, shape index: {}]
  %s1 = inlined_call_operand.vmem [shape: f32[32,1], index: 1, kind: input, shape index: {}]
  %s2 = inlined_call_operand.vmem [shape: f32[2,4,16], index: 2, kind: input, shape index: {}]
  %s3 = inlined_call_operand.vmem [shape: f32[2,32,16], index: 3, kind: output, shape index: {}]
  %s4 = sld [smem:[#allocation0]]
  $region45: #{naive_gcn_forward.1} parent=0
    _
  %s6 = ssub.s32 1, %s4
  %s7 = scalar_select 0, %s6, %s4
  loop: start=0, step=1, limit=4
  $region2: #{naive_gcn_forward.1} parent=0 // loop_pre_header
    _
  $region3: #{naive_gcn_forward.1} parent=0 // loop_header
    %s9 = sphi 0, %s13
    %p10 = scmp.ge.s32.totalorder %s9, 4
    %s16 = sphi 0, %s28
    %s17 = sphi 0, %s24
    %s18 = sphi 0, %s16
    %s19 = sphi 0, %s17
    %s20 = sphi 0, %s18
    %s21 = sphi 0, %s19
    %s29 = sphi 0, %s29
    %s31 = sphi 0, %s29
    %s32 = sphi 0, %s31
    %s46 = sphi 0, %s32
    %s50 = sphi 0, %s50
    %s52 = sphi 0, %s50
    %s53 = sphi 0, %s52
    %s67 = sphi 0, %s53
    %s75 = sphi 0, %s77
    %s78 = sphi 0, %s75
    %s79 = sphi 0, %s78
    %s95 = sphi 0, %s79
    %s103 = sphi 0, %s105
    %s106 = sphi 0, %s103
    %s107 = sphi 0, %s106
    %s123 = sphi 0, %s107
  $region4: #{naive_gcn_forward.1} parent=0 // loop_header_branch
    %12 = sbr.rel (%p10) target = $region8
  $region5: #{naive_gcn_forward.1} parent=0 // loop_body
    %s14 = ssub.s32 %s9, 1
    %s15 = ssub.s32 %s9, 2
    %s22 = sadd.s32 1, %s17
    %p23 = scmp.ge.s32.totalorder %s22, 1
    %s24 = scalar_select %p23, 0, %s22
    %s25 = sadd.s32 1, %s16
    %s26 = scalar_select %p23, %s25, %s16
    %p27 = scmp.ge.s32.totalorder %s26, 2
    %s28 = scalar_select %p27, 0, %s26
    %s30 = sadd.s32 %s29, 1
    %p33 = scmp.eq.s32.totalorder %s9, 1
    %p34 = scmp.ne.s32.totalorder %s29, %s31
    %p35 = scmp.eq.s32.totalorder %s9, 0
    %p36 = por %p34, %p35
    %p37 = scmp.ne.s32.totalorder %s29, %s31
    %p38 = scmp.eq.s32.totalorder %s14, 1
    %p39 = por %p37, %p38
    %p40 = scmp.ne.s32.totalorder %s31, %s32
    %p41 = scmp.eq.s32.totalorder %s14, 0
    %p42 = por %p40, %p41
    %p43 = scmp.ne.s32.totalorder %s31, %s32
    %p44 = scmp.eq.s32.totalorder %s15, 1
    %p45 = por %p43, %p44
    %p47 = scmp.ne.s32.totalorder %s32, %s46
    %p48 = scmp.eq.s32.totalorder %s15, 0
    %p49 = por %p47, %p48
    %s51 = sadd.s32 %s50, 1
    %p54 = scmp.eq.s32.totalorder %s9, 1
    %p55 = scmp.ne.s32.totalorder %s50, %s52
    %p56 = scmp.eq.s32.totalorder %s9, 0
    %p57 = por %p55, %p56
    %p58 = scmp.ne.s32.totalorder %s50, %s52
    %p59 = scmp.eq.s32.totalorder %s14, 1
    %p60 = por %p58, %p59
    %p61 = scmp.ne.s32.totalorder %s52, %s53
    %p62 = scmp.eq.s32.totalorder %s14, 0
    %p63 = por %p61, %p62
    %p64 = scmp.ne.s32.totalorder %s52, %s53
    %p65 = scmp.eq.s32.totalorder %s15, 1
    %p66 = por %p64, %p65
    %p68 = scmp.ne.s32.totalorder %s53, %s67
    %p69 = scmp.eq.s32.totalorder %s15, 0
    %p70 = por %p68, %p69
    %s71 = ssub.s32 %s16, %s28
    %s72 = ssub.s32 %s17, %s24
    %s73 = sor.u32 %s71, %s72
    %p74 = scmp.eq.s32.totalorder %s73, 0
    %s76 = sadd.s32 %s75, 1
    %s77 = scalar_select %p74, %s75, %s76
    %p80 = pneg %p74
    %p81 = scmp.eq.s32.totalorder %s9, 1
    %p82 = por %p80, %p81
    %p83 = scmp.ne.s32.totalorder %s75, %s78
    %p84 = scmp.eq.s32.totalorder %s9, 0
    %p85 = por %p83, %p84
    %p86 = scmp.ne.s32.totalorder %s75, %s78
    %p87 = scmp.eq.s32.totalorder %s14, 1
    %p88 = por %p86, %p87
    %p89 = scmp.ne.s32.totalorder %s78, %s79
    %p90 = scmp.eq.s32.totalorder %s14, 0
    %p91 = por %p89, %p90
    %p92 = scmp.ne.s32.totalorder %s78, %s79
    %p93 = scmp.eq.s32.totalorder %s15, 1
    %p94 = por %p92, %p93
    %p96 = scmp.ne.s32.totalorder %s79, %s95
    %p97 = scmp.eq.s32.totalorder %s15, 0
    %p98 = por %p96, %p97
    %s99 = ssub.s32 %s16, %s28
    %s100 = ssub.s32 %s17, %s24
    %s101 = sor.u32 %s99, %s100
    %p102 = scmp.eq.s32.totalorder %s101, 0
    %s104 = sadd.s32 %s103, 1
    %s105 = scalar_select %p102, %s103, %s104
    %p108 = pneg %p102
    %p109 = scmp.eq.s32.totalorder %s9, 1
    %p110 = por %p108, %p109
    %p111 = scmp.ne.s32.totalorder %s103, %s106
    %p112 = scmp.eq.s32.totalorder %s9, 0
    %p113 = por %p111, %p112
    %p114 = scmp.ne.s32.totalorder %s103, %s106
    %p115 = scmp.eq.s32.totalorder %s14, 1
    %p116 = por %p114, %p115
    %p117 = scmp.ne.s32.totalorder %s106, %s107
    %p118 = scmp.eq.s32.totalorder %s14, 0
    %p119 = por %p117, %p118
    %p120 = scmp.ne.s32.totalorder %s106, %s107
    %p121 = scmp.eq.s32.totalorder %s15, 1
    %p122 = por %p120, %p121
    %p124 = scmp.ne.s32.totalorder %s107, %s123
    %p125 = scmp.eq.s32.totalorder %s15, 0
    %p126 = por %p124, %p125
    %p127 = scmp.le.s32.totalorder 1, %s9
    %p128 = scmp.lt.s32.totalorder %s9, 3
    %p129 = pnand %p127, %p128
    %p130 = pneg %p129
    // Predicated region
    $region9: #{naive_gcn_forward.1} parent=5 // pred_check
      _
    $region10: #{naive_gcn_forward.1} parent=5 // pred_check_branch
      %132 = sbr.rel (%p129) target = $region12
    $region11: #{naive_gcn_forward.1} parent=5 // pred_region
      %s133 = ssub.s32 %s9, 1
      // Predicated region
      $region13: #{naive_gcn_forward.1} parent=11 // pred_check
        %p134 = pneg %p42
      $region14: #{naive_gcn_forward.1} parent=11 // pred_check_branch
        %136 = sbr.rel (%p134) target = $region16
      $region15: #{naive_gcn_forward.1} parent=11 // pred_region
        _
      $region16: #{naive_gcn_forward.1} parent=11 // pred_fallthru
        _
      // Predicated region
      $region17: #{naive_gcn_forward.1} parent=11 // pred_check
        %p137 = pneg %p63
      $region18: #{naive_gcn_forward.1} parent=11 // pred_check_branch
        %139 = sbr.rel (%p137) target = $region20
      $region19: #{naive_gcn_forward.1} parent=11 // pred_region
        _
      $region20: #{naive_gcn_forward.1} parent=11 // pred_fallthru
        _
    $region12: #{naive_gcn_forward.1} parent=5 // pred_fallthru
      _
    %p140 = scmp.lt.s32.totalorder %s9, 2
    // Predicated region
    $region21: #{naive_gcn_forward.1} parent=5 // pred_check
      %p141 = pneg %p140
    $region22: #{naive_gcn_forward.1} parent=5 // pred_check_branch
      %143 = sbr.rel (%p141) target = $region24
    $region23: #{naive_gcn_forward.1} parent=5 // pred_region
      // Predicated region
      $region25: #{naive_gcn_forward.1} parent=23 // pred_check
        %p144 = pneg %p85
      $region26: #{naive_gcn_forward.1} parent=23 // pred_check_branch
        %146 = sbr.rel (%p144) target = $region28
      $region27: #{naive_gcn_forward.1} parent=23 // pred_region
        %p147 = scmp.lt.s32.totalorder %s16, 1
        %s148 = scalar_select %p147, %s16, 1
        %p149 = scmp.lt.s32.totalorder %s17, 0
        %s150 = scalar_select %p149, %s17, 0
        %s151 = sadd.s32 %s150, %s148
        %s152 = smul.addr %s151, 4
        %s153 = scalar_lea.vmem %s2, %s152
      $region28: #{naive_gcn_forward.1} parent=23 // pred_fallthru
        _
    $region24: #{naive_gcn_forward.1} parent=5 // pred_fallthru
      _
    %p154 = scmp.le.s32.totalorder 1, %s9
    %p155 = scmp.lt.s32.totalorder %s9, 3
    %p156 = pnand %p154, %p155
    %p157 = pneg %p156
    // Predicated region
    $region29: #{naive_gcn_forward.1} parent=5 // pred_check
      _
    $region30: #{naive_gcn_forward.1} parent=5 // pred_check_branch
      %159 = sbr.rel (%p156) target = $region32
    $region31: #{naive_gcn_forward.1} parent=5 // pred_region
      %s160 = ssub.s32 %s9, 1
      %p161 = pneg %p42
      %p162 = pneg %p39
      %p163 = pneg %p63
      %p164 = pneg %p60
      %p165 = scmp.lt.s32.totalorder %s18, 1
      %s166 = scalar_select %p165, %s18, 1
      %p167 = scmp.lt.s32.totalorder %s19, 0
      %s168 = scalar_select %p167, %s19, 0
      %s169 = sadd.s32 %s168, %s166
      %s170 = smul.addr %s169, 4
      %s171 = scalar_lea.vmem %s2, %s170
      %p172 = pneg %p91
      %p173 = pneg %p88
      %p174 = pneg %p119
      %p175 = pneg %p116
      %p176 = scmp.lt.s32.totalorder %s18, 1
      %s177 = scalar_select %p176, %s18, 1
      %p178 = scmp.lt.s32.totalorder %s19, 0
      %s179 = scalar_select %p178, %s19, 0
      %s180 = smul.addr %s177, 4
      %s181 = sadd.s32 %s179, %s180
      %s182 = smul.addr %s181, 8
      %s183 = scalar_lea.vmem %s3, %s182
      %p184 = scmp.lt.s32.totalorder %s18, 1
      %s185 = scalar_select %p184, %s18, 1
      %p186 = scmp.lt.s32.totalorder %s19, 0
      %s187 = scalar_select %p186, %s19, 0
      %s188 = sadd.s32 %s187, %s185
      %s189 = smul.addr %s188, 4
      %s190 = scalar_lea.vmem %s2, %s189
      %p191 = scmp.lt.s32.totalorder %s18, 1
      %s192 = scalar_select %p191, %s18, 1
      %p193 = scmp.lt.s32.totalorder %s19, 0
      %s194 = scalar_select %p193, %s19, 0
      %s195 = smul.addr %s192, 4
      %s196 = sadd.s32 %s194, %s195
      %s197 = smul.addr %s196, 8
      %s198 = scalar_lea.vmem %s3, %s197
      %v199 = vld [vmem:[%s0] sm:$0xff]
      %v200 = vld [vmem:[%s0 + $0x8] sm:$0xff]
      %v201 = vld [vmem:[%s0 + $0x10] sm:$0xff]
      %v202 = vld [vmem:[%s0 + $0x18] sm:$0xff]
      %v203 = vld [vmem:[%s190] sm:$0xf]
      %v204 = vld [vmem:[%s1] sm:$0xff]
      %v205 = vld [vmem:[%s1 + $0x8] sm:$0xff]
      %v206 = vld [vmem:[%s1 + $0x10] sm:$0xff]
      %v207 = vld [vmem:[%s1 + $0x18] sm:$0xff]
      %209 = vset.pattern.permute.xlu0 0
      %210 = vperm.xlu0 %209, %v204
      %v211 = vpop.permute.xlu0 %210
      %214 = vset.pattern.permute.xlu0 0
      %215 = vperm.xlu0 %214, %v205
      %v216 = vpop.permute.xlu0 %215
      %219 = vset.pattern.permute.xlu0 0
      %220 = vperm.xlu0 %219, %v206
      %v221 = vpop.permute.xlu0 %220
      %224 = vset.pattern.permute.xlu0 0
      %225 = vperm.xlu0 %224, %v207
      %v226 = vpop.permute.xlu0 %225
      %vm228 = vcmask 31744
      %v230 = vsel %vm228, %v199, 0
      %v233 = vsel %vm228, %v200, 0
      %v236 = vsel %vm228, %v201, 0
      %v239 = vsel %vm228, %v202, 0
      %vm241 = vcmask 1043456
      %v243 = vsel %vm241, %v203, 0
      %245 = vmatprep.subr.mxu0 0.0
      %246 = vmatpush1.msra.mxu0 %v243
      %247 = vmatprep.subr.mxu0 0.0
      %248 = vmatpush1.msra.mxu0 0.0
      %249 = vmatprep.subr.mxu0 0.0
      %250 = vmatpush1.msra.mxu0 0.0
      %251 = vmatprep.subr.mxu0 0.0
      %252 = vmatpush1.msra.mxu0 0.0
      %253 = vmatprep.subr.mxu0 0.0
      %254 = vmatpush1.msra.mxu0 0.0
      %255 = vmatprep.subr.mxu0 0.0
      %256 = vmatpush1.msra.mxu0 0.0
      %257 = vmatprep.subr.mxu0 0.0
      %258 = vmatpush1.msra.mxu0 0.0
      %259 = vmatprep.subr.mxu0 0.0
      %260 = vmatpush1.msra.mxu0 0.0
      %261 = vmatprep.subr.mxu0 0.0
      %262 = vmatpush1.msra.mxu0 0.0
      %263 = vmatprep.subr.mxu0 0.0
      %264 = vmatpush1.msra.mxu0 0.0
      %265 = vmatprep.subr.mxu0 0.0
      %266 = vmatpush1.msra.mxu0 0.0
      %267 = vmatprep.subr.mxu0 0.0
      %268 = vmatpush1.msra.mxu0 0.0
      %269 = vmatprep.subr.mxu0 0.0
      %270 = vmatpush1.msra.mxu0 0.0
      %271 = vmatprep.subr.mxu0 0.0
      %272 = vmatpush1.msra.mxu0 0.0
      %273 = vmatprep.subr.mxu0 0.0
      %274 = vmatpush1.msra.mxu0 0.0
      %275 = vmatprep.subr.mxu0 0.0
      %276 = vmatpush1.msra.mxu0 0.0
      %277 = vmatprep.subr.mxu0 0.0
      %278 = vmatpush1.msra.mxu0 0.0
      %279 = vmatprep.subr.mxu0 0.0
      %280 = vmatpush1.msra.mxu0 0.0
      %281 = vmatprep.subr.mxu0 0.0
      %282 = vmatpush1.msra.mxu0 0.0
      %283 = vmatprep.subr.mxu0 0.0
      %284 = vmatpush1.msra.mxu0 0.0
      %285 = vmatprep.subr.mxu0 0.0
      %286 = vmatpush1.msra.mxu0 0.0
      %287 = vmatprep.subr.mxu0 0.0
      %288 = vmatpush1.msra.mxu0 0.0
      %289 = vmatprep.subr.mxu0 0.0
      %290 = vmatpush1.msra.mxu0 0.0
      %291 = vmatprep.subr.mxu0 0.0
      %292 = vmatpush1.msra.mxu0 0.0
      %293 = vmatprep.subr.mxu0 0.0
      %294 = vmatpush1.msra.mxu0 0.0
      %295 = vmatprep.subr.mxu0 0.0
      %296 = vmatpush1.msra.mxu0 0.0
      %297 = vmatprep.subr.mxu0 0.0
      %298 = vmatpush1.msra.mxu0 0.0
      %299 = vmatprep.subr.mxu0 0.0
      %300 = vmatpush1.msra.mxu0 0.0
      %301 = vmatprep.subr.mxu0 0.0
      %302 = vmatpush1.msra.mxu0 0.0
      %303 = vmatprep.subr.mxu0 0.0
      %304 = vmatpush1.msra.mxu0 0.0
      %305 = vmatprep.subr.mxu0 0.0
      %306 = vmatpush1.msra.mxu0 0.0
      %307 = vmatprep.subr.mxu0 0.0
      %308 = vmatpush1.msra.mxu0 0.0
      %309 = vmatprep.mubr.f32.mxu0 0.0
      %310 = vmatmul.mubr.f32.gmra.mrb[0].mxu0 %v230
      %v311 = vpop.f32.mrb[0].mxu0
      %v312 = vadd.f32 %v211, %v311
      %v313 = vpop.f32.mrb[0].mxu0
      %314 = vmatprep.mubr.f32.mxu0 0.0
      %315 = vmatmul.mubr.f32.gmra.mrb[0].mxu0 %v233
      %v316 = vpop.f32.mrb[0].mxu0
      %v317 = vadd.f32 %v216, %v316
      %v318 = vpop.f32.mrb[0].mxu0
      %319 = vmatprep.mubr.f32.mxu0 0.0
      %320 = vmatmul.mubr.f32.gmra.mrb[0].mxu0 %v236
      %v321 = vpop.f32.mrb[0].mxu0
      %v322 = vadd.f32 %v221, %v321
      %v323 = vpop.f32.mrb[0].mxu0
      %324 = vmatprep.mubr.f32.mxu0 0.0
      %325 = vmatmul.mubr.f32.gmra.mrb[0].mxu0 %v239
      %v326 = vpop.f32.mrb[0].mxu0
      %v327 = vadd.f32 %v226, %v326
      %v328 = vpop.f32.mrb[0].mxu0
      %329 = vdwg.mxu0
      %vm330 = vcmp.ge.f32.partialorder %v312, 0.0
      %vm331 = vcmp.ge.f32.partialorder %v317, 0.0
      %vm332 = vcmp.ge.f32.partialorder %v322, 0.0
      %vm333 = vcmp.ge.f32.partialorder %v327, 0.0
      %v334 = vmul.f32 %v312, 0.1
      %v335 = vmul.f32 %v317, 0.1
      %v336 = vmul.f32 %v322, 0.1
      %v337 = vmul.f32 %v327, 0.1
      %v338 = vsel %vm330, %v312, %v334
      %v339 = vsel %vm331, %v317, %v335
      %v340 = vsel %vm332, %v322, %v336
      %v341 = vsel %vm333, %v327, %v337
      %vm342 = vcmask 130048
      %343 = vst.msk [vmem:[%s198] sm:$0xff] %vm342, %v338
      %344 = vst.msk [vmem:[%s198 + $0x8] sm:$0xff] %vm342, %v339
      %345 = vst.msk [vmem:[%s198 + $0x10] sm:$0xff] %vm342, %v340
      %346 = vst.msk [vmem:[%s198 + $0x18] sm:$0xff] %vm342, %v341
      %p347 = scmp.lt.s32.totalorder %s18, 1
      %s348 = scalar_select %p347, %s18, 1
      %p349 = scmp.lt.s32.totalorder %s19, 0
      %s350 = scalar_select %p349, %s19, 0
      %s351 = smul.addr %s348, 4
      %s352 = sadd.s32 %s350, %s351
      %s353 = smul.addr %s352, 8
      %s354 = scalar_lea.vmem %s3, %s353
      // Predicated region
      $region33: #{naive_gcn_forward.1} parent=31 // pred_check
        %p355 = pneg %p116
      $region34: #{naive_gcn_forward.1} parent=31 // pred_check_branch
        %357 = sbr.rel (%p355) target = $region36
      $region35: #{naive_gcn_forward.1} parent=31 // pred_region
        _
      $region36: #{naive_gcn_forward.1} parent=31 // pred_fallthru
        _
    $region32: #{naive_gcn_forward.1} parent=5 // pred_fallthru
      _
    %p358 = scmp.le.s32.totalorder 2, %s9
    // Predicated region
    $region37: #{naive_gcn_forward.1} parent=5 // pred_check
      %p359 = pneg %p358
    $region38: #{naive_gcn_forward.1} parent=5 // pred_check_branch
      %361 = sbr.rel (%p359) target = $region40
    $region39: #{naive_gcn_forward.1} parent=5 // pred_region
      %s362 = ssub.s32 %s9, 2
      // Predicated region
      $region41: #{naive_gcn_forward.1} parent=39 // pred_check
        %p363 = pneg %p122
      $region42: #{naive_gcn_forward.1} parent=39 // pred_check_branch
        %365 = sbr.rel (%p363) target = $region44
      $region43: #{naive_gcn_forward.1} parent=39 // pred_region
        %p366 = scmp.lt.s32.totalorder %s20, 1
        %s367 = scalar_select %p366, %s20, 1
        %p368 = scmp.lt.s32.totalorder %s21, 0
        %s369 = scalar_select %p368, %s21, 0
        %s370 = smul.addr %s367, 4
        %s371 = sadd.s32 %s369, %s370
        %s372 = smul.addr %s371, 8
        %s373 = scalar_lea.vmem %s3, %s372
      $region44: #{naive_gcn_forward.1} parent=39 // pred_fallthru
        _
    $region40: #{naive_gcn_forward.1} parent=5 // pred_fallthru
      _
  $region6: #{naive_gcn_forward.1} parent=0 // loop_footer
    %s13 = sadd.s32 1, %s9
  $region7: #{naive_gcn_forward.1} parent=0 // loop_footer_branch
    %8 = sbr.rel target = $region3
  $region8: #{naive_gcn_forward.1} parent=0 // loop_exit
    _

</llo_original>
